<compile_context>
chip_gen: v6e
topology: v6e:2x2x1
jax: 0.10.0
libtpu: 0.0.40
codegen_flags: <defaults>
</compile_context>

<pallas_src>
import functools

import numpy as np
import jax
import jax.numpy as jnp
from jax.experimental import pallas as pl
from jax.experimental.pallas import tpu as pltpu


def _round_up(x, m):
    return (x + m - 1) // m * m


def _chip_info():
    """Returns (vmem budget in bytes, # TensorCores sharing the parallel axis)."""
    vmem_bytes = 64 * 1024 * 1024          # conservative default (v7x physical)
    try:
        vmem_bytes = int(pltpu.get_tpu_info().vmem_capacity_bytes)
    except Exception:
        pass
    num_tc = 1
    try:
        kind = jax.devices()[0].device_kind.lower()
        if "v7" in kind or "v4" in kind:   # 2 TensorCores (megacore) per chip
            num_tc = 2
    except Exception:
        pass
    # Leave headroom for compiler scratch / semaphores.
    return (vmem_bytes * 3) // 4, num_tc


def _pick_group(cout_pad, num_tc):
    """Output-channel rows per grid step (multiple of 8, divides cout_pad)."""
    if num_tc <= 1 or cout_pad < 8 * num_tc:
        # Single-TC chips: one big group -> no per-step grid overhead.
        return cout_pad
    g = max(8, ((cout_pad // num_tc) // 8) * 8)
    while g >= 8:
        if cout_pad % g == 0 and (cout_pad // g) % num_tc == 0:
            return g
        g -= 8
    return cout_pad


def _conv_bn_kernel(w_ref, x_ref, gamma_ref, beta_ref, out_ref, *, eps):
    """One output-channel group.

    w_ref:     (G, Kpad)  bf16  -- weights for this channel group
    x_ref:     (Kpad, M)  bf16  -- transposed im2col patches (grid-invariant)
    gamma_ref: (G, 1)     f32
    beta_ref:  (G, 1)     f32
    out_ref:   (G, M)           -- lane-dense output (M on lanes)
    """
    # Conv as a GEMM on the MXU: bf16 inputs, f32 accumulation.
    conv = jnp.dot(w_ref[...], x_ref[...],
                   preferred_element_type=jnp.float32)            # (G, M) f32

    # BatchNorm2d training-mode statistics: per-channel mean and biased
    # variance over all M = N*Hout*Wout positions (f32, two-pass centered
    # variance; conv stays resident in VMEM).
    mean = jnp.mean(conv, axis=1, keepdims=True)                  # (G, 1)
    var = jnp.mean(jnp.square(conv - mean), axis=1, keepdims=True)
    inv_std = jax.lax.rsqrt(var + eps)                            # EUP slot

    # Fold normalize + affine into per-channel scale/shift -> 2 ops/element.
    scale = gamma_ref[...] * inv_std                              # (G, 1)
    shift = beta_ref[...] - mean * scale                          # (G, 1)
    out_ref[...] = (conv * scale + shift).astype(out_ref.dtype)


def conv_bn(x_nchw, weight_oihw, gamma, beta, *, stride=1, pad=1, eps=1e-5,
            out_dtype=None):
    """Forward of ConvBn. x: (N, Cin, H, W) NCHW -> (N, Cout, Hout, Wout)."""
    N, Cin, H, W = x_nchw.shape
    Cout, Cin_w, KH, KW = weight_oihw.shape
    assert Cin_w == Cin
    if out_dtype is None:
        out_dtype = x_nchw.dtype   # match the module's dtype by default

    Hout = (H + 2 * pad - KH) // stride + 1
    Wout = (W + 2 * pad - KW) // stride + 1
    M = N * Hout * Wout
    K = KH * KW * Cin

    # Alignment: contraction dim only needs bf16 sublane alignment (16) on the
    # (Kpad, M) operand -- the MXU pads K internally, so padding to 128 would
    # only add HBM traffic and VMEM.  Cout pads to 16 (full bf16 sublane pack).
    Kpad = _round_up(K, 16)
    Cout_pad = _round_up(Cout, 16)

    vmem_budget, num_tc = _chip_info()
    group = _pick_group(Cout_pad, num_tc)
    num_groups = Cout_pad // group

    # ---- glue: build im2col patches directly in (K, M) order, in bf16 ------
    # Cast first so every glue pass moves half the bytes; one cheap leading-dim
    # transpose; no trailing HBM transpose or cast pass.
    x_cnhw = jnp.transpose(x_nchw.astype(jnp.bfloat16), (1, 0, 2, 3))
    x_sp = jnp.pad(x_cnhw, ((0, 0), (0, 0), (pad, pad), (pad, pad)))
    patches = []
    for kh in range(KH):
        for kw in range(KW):
            patches.append(
                x_sp[:, :, kh:kh + Hout * stride:stride,
                     kw:kw + Wout * stride:stride])      # (Cin, N, Hout, Wout)
    # k = (kh*KW + kw)*Cin + cin ;  m = n*Hout*Wout + h*Wout + w
    im2col_t = jnp.stack(patches, axis=0).reshape(K, M)
    im2col_t = jnp.pad(im2col_t, ((0, Kpad - K), (0, 0)))       # (Kpad, M) bf16

    # Weight OIHW -> (o, kh, kw, cin) -> (Cout, K), bf16, padded.
    w_t = jnp.transpose(weight_oihw.astype(jnp.bfloat16),
                        (0, 2, 3, 1)).reshape(Cout, K)
    w_t = jnp.pad(w_t, ((0, Cout_pad - Cout), (0, Kpad - K)))   # (Cout_pad, Kpad)

    # Zero-padded gamma/beta is what neutralizes the padded channel rows
    # (their inv_std = rsqrt(eps) otherwise leaks); keep this invariant.
    gamma2 = jnp.pad(gamma.astype(jnp.float32),
                     (0, Cout_pad - Cout)).reshape(Cout_pad, 1)
    beta2 = jnp.pad(beta.astype(jnp.float32),
                    (0, Cout_pad - Cout)).reshape(Cout_pad, 1)

    out_bytes = np.dtype(out_dtype).itemsize
    # VMEM estimate: single-buffered panel + double-buffered weight/output
    # blocks + the in-kernel f32 conv intermediate.
    block_bytes = (Kpad * M * 2                  # im2col panel (bf16, 1 buf)
                   + 2 * group * Kpad * 2        # weight group (bf16, 2 bufs)
                   + 2 * group * M * out_bytes   # output group (2 bufs)
                   + group * M * 4               # f32 conv intermediate
                   + 4 * Cout_pad * 4)           # gamma / beta
    assert block_bytes <= vmem_budget, (
        f"ConvBn panel ({block_bytes} B) exceeds the VMEM budget "
        f"({vmem_budget} B); an M-tiled two-pass BatchNorm variant is needed.")
    vmem_limit = None
    if block_bytes > 32 * 1024 * 1024:
        vmem_limit = min(vmem_budget, _round_up(block_bytes * 5 // 4, 1 << 20))

    cost = pl.CostEstimate(
        flops=2 * M * Kpad * Cout_pad,
        transcendentals=Cout_pad,
        bytes_accessed=(Kpad * M * 2 + Cout_pad * Kpad * 2
                        + 2 * Cout_pad * 4 + Cout_pad * M * out_bytes))

    kernel = functools.partial(_conv_bn_kernel, eps=eps)

    def _call(single_buffer_panel):
        panel_kwargs = (dict(pipeline_mode=pl.Buffered(1))
                        if single_buffer_panel else {})
        return pl.pallas_call(
            kernel,
            out_shape=jax.ShapeDtypeStruct((Cout_pad, M), out_dtype),
            grid_spec=pltpu.PrefetchScalarGridSpec(
                num_scalar_prefetch=0,
                grid=(num_groups,),
                in_specs=[
                    pl.BlockSpec((group, Kpad), lambda g: (g, 0)),   # weights
                    pl.BlockSpec((Kpad, M), lambda g: (0, 0),        # panel
                                 **panel_kwargs),
                    pl.BlockSpec((group, 1), lambda g: (g, 0)),      # gamma
                    pl.BlockSpec((group, 1), lambda g: (g, 0)),      # beta
                ],
                out_specs=pl.BlockSpec((group, M), lambda g: (g, 0)),
            ),
            compiler_params=pltpu.CompilerParams(
                dimension_semantics=("parallel",),
                vmem_limit_bytes=vmem_limit),
            cost_estimate=cost,
        )(w_t, im2col_t, gamma2, beta2)

    try:
        # Single-buffer the grid-invariant im2col panel: its index_map is
        # constant, so double-buffering only doubles VMEM with zero overlap.
        out_t = _call(True)
    except Exception:
        # pipeline_mode=pl.Buffered(1) unsupported on this jax version.
        out_t = _call(False)

    # ---- glue: (Cout_pad, M) -> (N, Cout, Hout, Wout) NCHW ------------------
    # TODO(synk): this final transpose is a full HBM pass kept only to match
    # the module's NCHW contract; a fused consumer should take (Cout, N, H, W).
    out = out_t[:Cout].reshape(Cout, N, Hout, Wout)
    return jnp.transpose(out, (1, 0, 2, 3))


def _reference(x_nchw, weight_oihw, gamma, beta, *, stride=1, pad=1, eps=1e-5):
    """Pure-JAX reference: lax conv + training-mode BatchNorm."""
    conv = jax.lax.conv_general_dilated(
        x_nchw, weight_oihw,
        window_strides=(stride, stride),
        padding=((pad, pad), (pad, pad)),
        dimension_numbers=("NCHW", "OIHW", "NCHW"))
    mean = conv.mean(axis=(0, 2, 3), keepdims=True)
    var = ((conv - mean) ** 2).mean(axis=(0, 2, 3), keepdims=True)
    g = gamma.reshape(1, -1, 1, 1)
    b = beta.reshape(1, -1, 1, 1)
    return (conv - mean) * jax.lax.rsqrt(var + eps) * g + b


if __name__ == "__main__":
    # Module config: ConvBn(in_channels=4, out_channels=8, kernel_size=3,
    # stride=1, pad=1); input x: (N=2, Cin=4, H=16, W=16).
    N, Cin, H, W = 2, 4, 16, 16
    Cout, Ksz = 8, 3

    key = jax.random.PRNGKey(0)
    k_x, k_w, k_g, k_b = jax.random.split(key, 4)
    x = jax.random.normal(k_x, (N, Cin, H, W), jnp.float32)
    weight = jax.random.normal(k_w, (Cout, Cin, Ksz, Ksz), jnp.float32) * 0.1
    gamma = 1.0 + 0.1 * jax.random.normal(k_g, (Cout,), jnp.float32)
    beta = 0.1 * jax.random.normal(k_b, (Cout,), jnp.float32)

    # Default path (output dtype matches the module: f32).
    out = conv_bn(x, weight, gamma, beta, stride=1, pad=1)
    out = jax.block_until_ready(out)
    assert out.shape == (N, Cout, H, W), out.shape

    # Bandwidth-optimized bf16-output path (stats / epilogue still in f32).
    out_bf16 = conv_bn(x, weight, gamma, beta, stride=1, pad=1,
                       out_dtype=jnp.bfloat16)
    out_bf16 = jax.block_until_ready(out_bf16)
    assert out_bf16.shape == (N, Cout, H, W)
    assert out_bf16.dtype == jnp.bfloat16

    # Tight check: reference evaluated on the same bf16-rounded matmul inputs
    # (the kernel intentionally feeds the MXU bf16), isolating kernel math
    # correctness from input-rounding error.
    x_r = x.astype(jnp.bfloat16).astype(jnp.float32)
    w_r = weight.astype(jnp.bfloat16).astype(jnp.float32)
    ref = _reference(x_r, w_r, gamma, beta, stride=1, pad=1)
    err = float(jnp.max(jnp.abs(out - ref)))
    assert jnp.allclose(out, ref, atol=2e-3, rtol=2e-3), f"max abs err = {err}"

    # Loose sanity checks vs. the full-f32 reference (bf16 MXU inputs).
    ref32 = _reference(x, weight, gamma, beta, stride=1, pad=1)
    err32 = float(jnp.max(jnp.abs(out - ref32)))
    assert jnp.allclose(out, ref32, atol=5e-2, rtol=5e-2), (
        f"max abs err vs f32 ref = {err32}")
    err_bf = float(jnp.max(jnp.abs(out_bf16.astype(jnp.float32) - ref32)))
    assert jnp.allclose(out_bf16.astype(jnp.float32), ref32,
                        atol=8e-2, rtol=5e-2), (
        f"max abs err (bf16 out) vs f32 ref = {err_bf}")

    print("KERNEL_OK")
</pallas_src>

<mosaic_0001>
module attributes {stable_mosaic.version = 11 : i64} {
  func.func @_conv_bn_kernel(%arg0: i32, %arg1: memref<16x48xbf16, #tpu.memory_space<vmem>>, %arg2: memref<48x512xbf16, #tpu.memory_space<vmem>>, %arg3: memref<16x1xf32, #tpu.memory_space<vmem>>, %arg4: memref<16x1xf32, #tpu.memory_space<vmem>>, %arg5: memref<16x512xf32, #tpu.memory_space<vmem>>) attributes {dimension_semantics = [#tpu.dimension_semantics<parallel>], iteration_bounds = array<i64: 1>, scalar_prefetch = 0 : i64, scratch_operands = 0 : i64, tpu.core_type = #tpu.core_type<tc>, window_params = [{transform_indices = @transform_0, window_bounds = array<i64: 16, 48>}, {pipeline_mode = #tpu.pipeline_mode<synchronous>, transform_indices = @transform_1, window_bounds = array<i64: 48, 512>}, {transform_indices = @transform_2, window_bounds = array<i64: 16, 1>}, {transform_indices = @transform_3, window_bounds = array<i64: 16, 1>}, {transform_indices = @transform_4, window_bounds = array<i64: 16, 512>}]} {
    %c0 = arith.constant 0 : index
    %c0_0 = arith.constant 0 : index
    %0 = vector.load %arg1[%c0, %c0_0] : memref<16x48xbf16, #tpu.memory_space<vmem>>, vector<16x48xbf16>
    %c0_1 = arith.constant 0 : index
    %c0_2 = arith.constant 0 : index
    %1 = vector.load %arg2[%c0_1, %c0_2] : memref<48x512xbf16, #tpu.memory_space<vmem>>, vector<48x512xbf16>
    %cst = arith.constant dense<0.000000e+00> : vector<16x512xf32>
    %2 = tpu.matmul %0, %1, %cst {dimension_numbers = #tpu.dot_dimension_numbers<[1], [0], [0], [1], [0, 0, 1, 1], [], []>} : vector<16x48xbf16>, vector<48x512xbf16>, vector<16x512xf32> -> vector<16x512xf32>
    %cst_3 = arith.constant dense<0.000000e+00> : vector<16xf32>
    %3 = vector.multi_reduction <add>, %2, %cst_3 [1] : vector<16x512xf32> to vector<16xf32>
    %4 = vector.shape_cast %3 : vector<16xf32> to vector<16x1xf32>
    %cst_4 = arith.constant 5.120000e+02 : f32
    %5 = vector.broadcast %cst_4 : f32 to vector<16x1xf32>
    %6 = arith.divf %4, %5 : vector<16x1xf32>
    %7 = vector.broadcast %6 : vector<16x1xf32> to vector<16x512xf32>
    %8 = arith.subf %2, %7 : vector<16x512xf32>
    %9 = arith.mulf %8, %8 : vector<16x512xf32>
    %cst_5 = arith.constant dense<0.000000e+00> : vector<16xf32>
    %10 = vector.multi_reduction <add>, %9, %cst_5 [1] : vector<16x512xf32> to vector<16xf32>
    %11 = vector.shape_cast %10 : vector<16xf32> to vector<16x1xf32>
    %cst_6 = arith.constant 5.120000e+02 : f32
    %12 = vector.broadcast %cst_6 : f32 to vector<16x1xf32>
    %13 = arith.divf %11, %12 : vector<16x1xf32>
    %cst_7 = arith.constant 9.99999974E-6 : f32
    %14 = vector.broadcast %cst_7 : f32 to vector<16x1xf32>
    %15 = arith.addf %13, %14 : vector<16x1xf32>
    %16 = math.rsqrt %15 : vector<16x1xf32>
    %c0_8 = arith.constant 0 : index
    %c0_9 = arith.constant 0 : index
    %17 = vector.load %arg3[%c0_8, %c0_9] : memref<16x1xf32, #tpu.memory_space<vmem>>, vector<16x1xf32>
    %18 = arith.mulf %17, %16 : vector<16x1xf32>
    %c0_10 = arith.constant 0 : index
    %c0_11 = arith.constant 0 : index
    %19 = vector.load %arg4[%c0_10, %c0_11] : memref<16x1xf32, #tpu.memory_space<vmem>>, vector<16x1xf32>
    %20 = arith.mulf %6, %18 : vector<16x1xf32>
    %21 = arith.subf %19, %20 : vector<16x1xf32>
    %22 = vector.broadcast %18 : vector<16x1xf32> to vector<16x512xf32>
    %23 = arith.mulf %2, %22 : vector<16x512xf32>
    %24 = vector.broadcast %21 : vector<16x1xf32> to vector<16x512xf32>
    %25 = arith.addf %23, %24 : vector<16x512xf32>
    %c0_12 = arith.constant 0 : index
    %c0_13 = arith.constant 0 : index
    %26 = vector.load %arg5[%c0_12, %c0_13] : memref<16x512xf32, #tpu.memory_space<vmem>>, vector<16x512xf32>
    tpu.vector_store %arg5[%c0_12, %c0_13], %25 {strides = array<i32>} : memref<16x512xf32, #tpu.memory_space<vmem>>, vector<16x512xf32>,
    return
  }
  func.func @transform_0(%arg0: i32) -> (i32, i32) {
    %c0_i32 = arith.constant 0 : i32
    %c0_i32_0 = arith.constant 0 : i32
    return %arg0, %c0_i32 : i32, i32
  }
  func.func @transform_1(%arg0: i32) -> (i32, i32) {
    %c0_i32 = arith.constant 0 : i32
    %c0_i32_0 = arith.constant 0 : i32
    %c0_i32_1 = arith.constant 0 : i32
    return %c0_i32, %c0_i32_0 : i32, i32
  }
  func.func @transform_2(%arg0: i32) -> (i32, i32) {
    %c0_i32 = arith.constant 0 : i32
    %c0_i32_0 = arith.constant 0 : i32
    return %arg0, %c0_i32 : i32, i32
  }
  func.func @transform_3(%arg0: i32) -> (i32, i32) {
    %c0_i32 = arith.constant 0 : i32
    %c0_i32_0 = arith.constant 0 : i32
    return %arg0, %c0_i32 : i32, i32
  }
  func.func @transform_4(%arg0: i32) -> (i32, i32) {
    %c0_i32 = arith.constant 0 : i32
    %c0_i32_0 = arith.constant 0 : i32
    return %arg0, %c0_i32 : i32, i32
  }
}

module attributes {stable_mosaic.version = 11 : i64} {
  func.func @_conv_bn_kernel(%arg0: i32, %arg1: memref<16x48xbf16, #tpu.memory_space<vmem>>, %arg2: memref<48x512xbf16, #tpu.memory_space<vmem>>, %arg3: memref<16x1xf32, #tpu.memory_space<vmem>>, %arg4: memref<16x1xf32, #tpu.memory_space<vmem>>, %arg5: memref<16x512xf32, #tpu.memory_space<vmem>>) attributes {dimension_semantics = [#tpu.dimension_semantics<parallel>], iteration_bounds = array<i64: 1>, scalar_prefetch = 0 : i64, scratch_operands = 0 : i64, tpu.core_type = #tpu.core_type<tc>, window_params = [{transform_indices = @transform_0, window_bounds = array<i64: 16, 48>}, {pipeline_mode = #tpu.pipeline_mode<synchronous>, transform_indices = @transform_1, window_bounds = array<i64: 48, 512>}, {transform_indices = @transform_2, window_bounds = array<i64: 16, 1>}, {transform_indices = @transform_3, window_bounds = array<i64: 16, 1>}, {transform_indices = @transform_4, window_bounds = array<i64: 16, 512>}]} {
    %c0 = arith.constant 0 : index
    %c0_0 = arith.constant 0 : index
    %0 = vector.load %arg1[%c0, %c0_0] : memref<16x48xbf16, #tpu.memory_space<vmem>>, vector<16x48xbf16>
    %c0_1 = arith.constant 0 : index
    %c0_2 = arith.constant 0 : index
    %1 = vector.load %arg2[%c0_1, %c0_2] : memref<48x512xbf16, #tpu.memory_space<vmem>>, vector<48x512xbf16>
    %cst = arith.constant dense<0.000000e+00> : vector<16x512xf32>
    %2 = tpu.matmul %0, %1, %cst {dimension_numbers = #tpu.dot_dimension_numbers<[1], [0], [0], [1], [0, 0, 1, 1], [], []>} : vector<16x48xbf16>, vector<48x512xbf16>, vector<16x512xf32> -> vector<16x512xf32>
    %cst_3 = arith.constant dense<0.000000e+00> : vector<16xf32>
    %3 = vector.multi_reduction <add>, %2, %cst_3 [1] : vector<16x512xf32> to vector<16xf32>
    %4 = vector.shape_cast %3 : vector<16xf32> to vector<16x1xf32>
    %cst_4 = arith.constant 5.120000e+02 : f32
    %5 = vector.broadcast %cst_4 : f32 to vector<16x1xf32>
    %6 = arith.divf %4, %5 : vector<16x1xf32>
    %7 = vector.broadcast %6 : vector<16x1xf32> to vector<16x512xf32>
    %8 = arith.subf %2, %7 : vector<16x512xf32>
    %9 = arith.mulf %8, %8 : vector<16x512xf32>
    %cst_5 = arith.constant dense<0.000000e+00> : vector<16xf32>
    %10 = vector.multi_reduction <add>, %9, %cst_5 [1] : vector<16x512xf32> to vector<16xf32>
    %11 = vector.shape_cast %10 : vector<16xf32> to vector<16x1xf32>
    %cst_6 = arith.constant 5.120000e+02 : f32
    %12 = vector.broadcast %cst_6 : f32 to vector<16x1xf32>
    %13 = arith.divf %11, %12 : vector<16x1xf32>
    %cst_7 = arith.constant 9.99999974E-6 : f32
    %14 = vector.broadcast %cst_7 : f32 to vector<16x1xf32>
    %15 = arith.addf %13, %14 : vector<16x1xf32>
    %16 = math.rsqrt %15 : vector<16x1xf32>
    %c0_8 = arith.constant 0 : index
    %c0_9 = arith.constant 0 : index
    %17 = vector.load %arg3[%c0_8, %c0_9] : memref<16x1xf32, #tpu.memory_space<vmem>>, vector<16x1xf32>
    %18 = arith.mulf %17, %16 : vector<16x1xf32>
    %c0_10 = arith.constant 0 : index
    %c0_11 = arith.constant 0 : index
    %19 = vector.load %arg4[%c0_10, %c0_11] : memref<16x1xf32, #tpu.memory_space<vmem>>, vector<16x1xf32>
    %20 = arith.mulf %6, %18 : vector<16x1xf32>
    %21 = arith.subf %19, %20 : vector<16x1xf32>
    %22 = vector.broadcast %18 : vector<16x1xf32> to vector<16x512xf32>
    %23 = arith.mulf %2, %22 : vector<16x512xf32>
    %24 = vector.broadcast %21 : vector<16x1xf32> to vector<16x512xf32>
    %25 = arith.addf %23, %24 : vector<16x512xf32>
    %c0_12 = arith.constant 0 : index
    %c0_13 = arith.constant 0 : index
    %26 = vector.load %arg5[%c0_12, %c0_13] : memref<16x512xf32, #tpu.memory_space<vmem>>, vector<16x512xf32>
    tpu.vector_store %arg5[%c0_12, %c0_13], %25 {strides = array<i32>} : memref<16x512xf32, #tpu.memory_space<vmem>>, vector<16x512xf32>,
    return
  }
  func.func @transform_0(%arg0: i32) -> (i32, i32) {
    %c0_i32 = arith.constant 0 : i32
    %c0_i32_0 = arith.constant 0 : i32
    return %arg0, %c0_i32 : i32, i32
  }
  func.func @transform_1(%arg0: i32) -> (i32, i32) {
    %c0_i32 = arith.constant 0 : i32
    %c0_i32_0 = arith.constant 0 : i32
    %c0_i32_1 = arith.constant 0 : i32
    return %c0_i32, %c0_i32_0 : i32, i32
  }
  func.func @transform_2(%arg0: i32) -> (i32, i32) {
    %c0_i32 = arith.constant 0 : i32
    %c0_i32_0 = arith.constant 0 : i32
    return %arg0, %c0_i32 : i32, i32
  }
  func.func @transform_3(%arg0: i32) -> (i32, i32) {
    %c0_i32 = arith.constant 0 : i32
    %c0_i32_0 = arith.constant 0 : i32
    return %arg0, %c0_i32 : i32, i32
  }
  func.func @transform_4(%arg0: i32) -> (i32, i32) {
    %c0_i32 = arith.constant 0 : i32
    %c0_i32_0 = arith.constant 0 : i32
    return %arg0, %c0_i32 : i32, i32
  }
}

</mosaic_0001>

<llo_original>
// kernel: tpu_custom_call.1
$region0: #{tpu_custom_call.1}
  #allocation0 [shape = 'u32[]', space=smem, size = 0x4, offset = 0x4, fixed_abs, tag = 'smem constant byte address 0x4 - core index']
  #allocation1 [shape = 'u32[144,128]{1,0:T(1,128)}', space=vmem, size = 0x12000, scoped, tag = 'internal scratch']
  %s0 = inlined_call_operand.vmem [shape: bf16[16,48], index: 0, kind: input, shape index: {}]
  %s1 = inlined_call_operand.hbm [shape: bf16[48,512], index: 1, kind: input, shape index: {}]
  %s2 = inlined_call_operand.vmem [shape: f32[16,1], index: 2, kind: input, shape index: {}]
  %s3 = inlined_call_operand.vmem [shape: f32[16,1], index: 3, kind: input, shape index: {}]
  %s4 = inlined_call_operand.hbm [shape: f32[16,512], index: 4, kind: output, shape index: {}]
  %s5 = sld [smem:[#allocation0]]
  $region30: #{tpu_custom_call.1} parent=0
    _
  %s7 = ssub.s32 1, %s5
  %s8 = scalar_select 0, %s7, %s5
  $region1: #{tpu_custom_call.1} parent=0
    #allocation2 [shape = 'u8[49152]{0}', space=vmem, size = 0xc000, scoped, tag = 'input window, operand 1, single buffered']
    #allocation3 [shape = 's32[1]{0}', space=sflag, size = 0x4, scoped, tag = 'scoped memory for tpu_custom_call.1']
    #allocation4 [shape = 's32[1]{0}', space=sflag, size = 0x4, scoped, tag = 'scoped memory for tpu_custom_call.1']
    #allocation5 [shape = 'u8[32768]{0}', space=vmem, size = 0x8000, scoped, tag = 'output window, operand 0, single buffered']
    %9 = vsyncpa [#allocation3], 0
    %10 = vsyncpa [#allocation4], 0
    // Predicated region
    $region2: #{tpu_custom_call.1} parent=1 // pred_check
      _
    $region3: #{tpu_custom_call.1} parent=1 // pred_check_branch
      %12 = sbr.rel (0) target = $region5
    $region4: #{tpu_custom_call.1} parent=1 // pred_region
      _
    $region5: #{tpu_custom_call.1} parent=1 // pred_fallthru
      _
    // Predicated region
    $region6: #{tpu_custom_call.1} parent=1 // pred_check
      _
    $region7: #{tpu_custom_call.1} parent=1 // pred_check_branch
      %14 = sbr.rel (0) target = $region9
    $region8: #{tpu_custom_call.1} parent=1 // pred_region
      %s16 = ssub.s32 1536, 1536
      %17 = vsyncadd [#allocation3], %s16
      %s18 = sshll.u32 [#allocation2], 4
      %s19 = int_to_ptr.vmem [resolvable:$true] %s18
      %24 = dma.hbm_to_vmem [thread:$0]  %s1, 1536, %s19, [#allocation3], 256, 256, 16
    $region9: #{tpu_custom_call.1} parent=1 // pred_fallthru
      _
    // Predicated region
    $region10: #{tpu_custom_call.1} parent=1 // pred_check
      _
    $region11: #{tpu_custom_call.1} parent=1 // pred_check_branch
      %26 = sbr.rel (0) target = $region13
    $region12: #{tpu_custom_call.1} parent=1 // pred_region
      _
    $region13: #{tpu_custom_call.1} parent=1 // pred_fallthru
      _
    // Predicated region
    $region14: #{tpu_custom_call.1} parent=1 // pred_check
      _
    $region15: #{tpu_custom_call.1} parent=1 // pred_check_branch
      %28 = sbr.rel (0) target = $region17
    $region16: #{tpu_custom_call.1} parent=1 // pred_region
      _
    $region17: #{tpu_custom_call.1} parent=1 // pred_fallthru
      _
    // Predicated region
    $region18: #{tpu_custom_call.1} parent=1 // pred_check
      _
    $region19: #{tpu_custom_call.1} parent=1 // pred_check_branch
      %30 = sbr.rel (0) target = $region21
    $region20: #{tpu_custom_call.1} parent=1 // pred_region
      %31 = dma.done [#allocation3], 1536
    $region21: #{tpu_custom_call.1} parent=1 // pred_fallthru
      _
    %v33 = vld [vmem:[%s0] sm:$0xf]
    %v34 = vld [vmem:[%s0 + $0x4] sm:$0xf]
    %v35 = vld [vmem:[#allocation2] sm:$0xff]
    %v36 = vld [vmem:[#allocation2 + $0x8] sm:$0xff]
    %v37 = vld [vmem:[#allocation2 + $0x10] sm:$0xff]
    %v38 = vld [vmem:[#allocation2 + $0x18] sm:$0xff]
    %v39 = vld [vmem:[#allocation2 + $0x20] sm:$0xff]
    %v40 = vld [vmem:[#allocation2 + $0x28] sm:$0xff]
    %v41 = vld [vmem:[#allocation2 + $0x30] sm:$0xff]
    %v42 = vld [vmem:[#allocation2 + $0x38] sm:$0xff]
    %v43 = vld [vmem:[#allocation2 + $0x40] sm:$0xff]
    %v44 = vld [vmem:[#allocation2 + $0x48] sm:$0xff]
    %v45 = vld [vmem:[#allocation2 + $0x50] sm:$0xff]
    %v46 = vld [vmem:[#allocation2 + $0x58] sm:$0xff]
    %v49 = vunpack.c.l.b16 %v33
    %v50 = vunpack.c.l.b16 %v34
    %v51 = vpack.c.b16 %v50, %v49
    %v64 = vunpack.c.l.b16 %v35
    %v65 = vunpack.c.h.b16 %v35
    %v66 = vunpack.c.l.b16 %v36
    %v67 = vunpack.c.h.b16 %v36
    %v68 = vunpack.c.l.b16 %v37
    %v69 = vunpack.c.h.b16 %v37
    %v70 = vunpack.c.l.b16 %v38
    %v71 = vunpack.c.h.b16 %v38
    %v72 = vunpack.c.l.b16 %v39
    %v73 = vunpack.c.h.b16 %v39
    %v74 = vunpack.c.l.b16 %v40
    %v75 = vunpack.c.h.b16 %v40
    %v76 = vunpack.c.l.b16 %v41
    %v77 = vunpack.c.h.b16 %v41
    %v78 = vunpack.c.l.b16 %v42
    %v79 = vunpack.c.h.b16 %v42
    %v80 = vunpack.c.l.b16 %v43
    %v81 = vunpack.c.h.b16 %v43
    %v82 = vunpack.c.l.b16 %v44
    %v83 = vunpack.c.h.b16 %v44
    %v84 = vunpack.c.l.b16 %v45
    %v85 = vunpack.c.h.b16 %v45
    %v86 = vunpack.c.l.b16 %v46
    %v87 = vunpack.c.h.b16 %v46
    %v88 = vpack.c.b16 %v68, %v64
    %v89 = vpack.c.b16 %v69, %v65
    %v90 = vpack.c.b16 %v70, %v66
    %v91 = vpack.c.b16 %v71, %v67
    %v92 = vpack.c.b16 %v76, %v72
    %v93 = vpack.c.b16 %v77, %v73
    %v94 = vpack.c.b16 %v78, %v74
    %v95 = vpack.c.b16 %v79, %v75
    %v96 = vpack.c.b16 %v84, %v80
    %v97 = vpack.c.b16 %v85, %v81
    %v98 = vpack.c.b16 %v86, %v82
    %v99 = vpack.c.b16 %v87, %v83
    %vm112 = vcmask 392192
    %v114 = vsel %vm112, %v51, 0
    %116 = vmatprep.subr.bf16.mxu0 0
    %117 = vmatpush1.bf16.msra.mxu0 0
    %118 = vmatprep.subr.bf16.mxu0 0
    %119 = vmatpush1.bf16.msra.mxu0 0
    %120 = vmatprep.subr.bf16.mxu0 0
    %121 = vmatpush1.bf16.msra.mxu0 0
    %122 = vmatprep.subr.bf16.mxu0 0
    %123 = vmatpush1.bf16.msra.mxu0 0
    %124 = vmatprep.subr.bf16.mxu0 0
    %125 = vmatpush1.bf16.msra.mxu0 0
    %126 = vmatprep.subr.bf16.mxu0 %v97
    %127 = vmatpush1.bf16.msra.mxu0 %v96
    %128 = vmatprep.subr.bf16.mxu0 %v93
    %129 = vmatpush1.bf16.msra.mxu0 %v92
    %130 = vmatprep.subr.bf16.mxu0 %v89
    %131 = vmatpush1.bf16.msra.mxu0 %v88
    %132 = vmatprep.subr.bf16.mxu0 0
    %133 = vmatpush2.bf16.msra.mxu0 0
    %134 = vmatprep.subr.bf16.mxu0 0
    %135 = vmatpush2.bf16.msra.mxu0 0
    %136 = vmatprep.subr.bf16.mxu0 0
    %137 = vmatpush2.bf16.msra.mxu0 0
    %138 = vmatprep.subr.bf16.mxu0 0
    %139 = vmatpush2.bf16.msra.mxu0 0
    %140 = vmatprep.subr.bf16.mxu0 0
    %141 = vmatpush2.bf16.msra.mxu0 0
    %142 = vmatprep.subr.bf16.mxu0 0
    %143 = vmatpush2.bf16.msra.mxu0 0
    %144 = vmatprep.subr.bf16.mxu0 0
    %145 = vmatpush2.bf16.msra.mxu0 0
    %146 = vmatprep.subr.bf16.mxu0 0
    %147 = vmatpush2.bf16.msra.mxu0 0
    %148 = vmatprep.mubr.bf16.mxu0 0
    %149 = vmatmul.mubr.bf16.gmra.mxu0 %v114
    %v150 = vpop.f32.mrf.mxu0
    %v151 = vadd.f32 0.0, %v150
    %v152 = vpop.f32.mrf.mxu0
    %v153 = vadd.f32 0.0, %v152
    %v154 = vpop.f32.mrf.mxu0
    %v155 = vadd.f32 0.0, %v154
    %v156 = vpop.f32.mrf.mxu0
    %v157 = vadd.f32 0.0, %v156
    %158 = vdwg.mxu0
    %159 = vmatprep.subr.bf16.mxu0 0
    %160 = vmatpush1.bf16.msra.mxu0 0
    %161 = vmatprep.subr.bf16.mxu0 0
    %162 = vmatpush1.bf16.msra.mxu0 0
    %163 = vmatprep.subr.bf16.mxu0 0
    %164 = vmatpush1.bf16.msra.mxu0 0
    %165 = vmatprep.subr.bf16.mxu0 0
    %166 = vmatpush1.bf16.msra.mxu0 0
    %167 = vmatprep.subr.bf16.mxu0 0
    %168 = vmatpush1.bf16.msra.mxu0 0
    %169 = vmatprep.subr.bf16.mxu0 %v99
    %170 = vmatpush1.bf16.msra.mxu0 %v98
    %171 = vmatprep.subr.bf16.mxu0 %v95
    %172 = vmatpush1.bf16.msra.mxu0 %v94
    %173 = vmatprep.subr.bf16.mxu0 %v91
    %174 = vmatpush1.bf16.msra.mxu0 %v90
    %175 = vmatprep.subr.bf16.mxu0 0
    %176 = vmatpush2.bf16.msra.mxu0 0
    %177 = vmatprep.subr.bf16.mxu0 0
    %178 = vmatpush2.bf16.msra.mxu0 0
    %179 = vmatprep.subr.bf16.mxu0 0
    %180 = vmatpush2.bf16.msra.mxu0 0
    %181 = vmatprep.subr.bf16.mxu0 0
    %182 = vmatpush2.bf16.msra.mxu0 0
    %183 = vmatprep.subr.bf16.mxu0 0
    %184 = vmatpush2.bf16.msra.mxu0 0
    %185 = vmatprep.subr.bf16.mxu0 0
    %186 = vmatpush2.bf16.msra.mxu0 0
    %187 = vmatprep.subr.bf16.mxu0 0
    %188 = vmatpush2.bf16.msra.mxu0 0
    %189 = vmatprep.subr.bf16.mxu0 0
    %190 = vmatpush2.bf16.msra.mxu0 0
    %191 = vmatprep.mubr.bf16.mxu0 0
    %192 = vmatmul.mubr.bf16.gmra.mxu0 %v114
    %v193 = vpop.f32.mrf.mxu0
    %v194 = vadd.f32 0.0, %v193
    %v195 = vpop.f32.mrf.mxu0
    %v196 = vadd.f32 0.0, %v195
    %v197 = vpop.f32.mrf.mxu0
    %v198 = vadd.f32 0.0, %v197
    %v199 = vpop.f32.mrf.mxu0
    %v200 = vadd.f32 0.0, %v199
    %201 = vdwg.mxu0
    %v202 = vadd.f32 %v151, %v153
    %v203 = vadd.f32 %v202, %v194
    %v204 = vadd.f32 %v203, %v196
    %205 = vadd.xlane.f32.xlu0 %v204
    %v206 = vpop.xlane.xlu0 %205
    %v207 = vadd.f32 %v155, %v157
    %v208 = vadd.f32 %v207, %v198
    %v209 = vadd.f32 %v208, %v200
    %210 = vadd.xlane.f32.xlu0 %v209
    %v211 = vpop.xlane.xlu0 %210
    %v212 = vrcp.pop 512.0
    %v213 = vmul.f32 %v206, %v212
    %v214 = vmul.f32 %v211, %v212
    %v215 = vsub.f32 %v151, %v213
    %v216 = vsub.f32 %v153, %v213
    %v217 = vsub.f32 %v194, %v213
    %v218 = vsub.f32 %v196, %v213
    %v219 = vsub.f32 %v155, %v214
    %v220 = vsub.f32 %v157, %v214
    %v221 = vsub.f32 %v198, %v214
    %v222 = vsub.f32 %v200, %v214
    %v223 = vmul.f32 %v215, %v215
    %v224 = vmul.f32 %v216, %v216
    %v225 = vmul.f32 %v217, %v217
    %v226 = vmul.f32 %v218, %v218
    %v227 = vmul.f32 %v219, %v219
    %v228 = vmul.f32 %v220, %v220
    %v229 = vmul.f32 %v221, %v221
    %v230 = vmul.f32 %v222, %v222
    %v231 = vadd.f32 %v223, %v224
    %v232 = vadd.f32 %v231, %v225
    %v233 = vadd.f32 %v232, %v226
    %234 = vadd.xlane.f32.xlu0 %v233
    %v235 = vpop.xlane.xlu0 %234
    %v236 = vadd.f32 %v227, %v228
    %v237 = vadd.f32 %v236, %v229
    %v238 = vadd.f32 %v237, %v230
    %239 = vadd.xlane.f32.xlu0 %v238
    %v240 = vpop.xlane.xlu0 %239
    %v241 = vmul.f32 %v235, %v212
    %v242 = vmul.f32 %v240, %v212
    %v243 = vadd.f32 %v241, 1e-05
    %v244 = vadd.f32 %v242, 1e-05
    %v245 = vrsqrt.pop %v243
    %v246 = vrsqrt.pop %v244
    %v247 = vld [vmem:[%s2] sm:$0xff]
    %v248 = vld [vmem:[%s2 + $0x8] sm:$0xff]
    %v249 = vmul.f32 %v247, %v245
    %v250 = vmul.f32 %v248, %v246
    %v251 = vld [vmem:[%s3] sm:$0xff]
    %v252 = vld [vmem:[%s3 + $0x8] sm:$0xff]
    %v253 = vmul.f32 %v213, %v249
    %v254 = vmul.f32 %v214, %v250
    %v255 = vsub.f32 %v251, %v253
    %v256 = vsub.f32 %v252, %v254
    %258 = vset.pattern.permute.xlu0 0
    %259 = vperm.xlu0 %258, %v249
    %v260 = vpop.permute.xlu0 %259
    %263 = vset.pattern.permute.xlu0 0
    %264 = vperm.xlu0 %263, %v250
    %v265 = vpop.permute.xlu0 %264
    %v267 = vmul.f32 %v151, %v260
    %v268 = vmul.f32 %v153, %v260
    %v269 = vmul.f32 %v194, %v260
    %v270 = vmul.f32 %v196, %v260
    %v271 = vmul.f32 %v155, %v265
    %v272 = vmul.f32 %v157, %v265
    %v273 = vmul.f32 %v198, %v265
    %v274 = vmul.f32 %v200, %v265
    %276 = vset.pattern.permute.xlu0 0
    %277 = vperm.xlu0 %276, %v255
    %v278 = vpop.permute.xlu0 %277
    %281 = vset.pattern.permute.xlu0 0
    %282 = vperm.xlu0 %281, %v256
    %v283 = vpop.permute.xlu0 %282
    %v285 = vadd.f32 %v267, %v278
    %v286 = vadd.f32 %v268, %v278
    %v287 = vadd.f32 %v269, %v278
    %v288 = vadd.f32 %v270, %v278
    %v289 = vadd.f32 %v271, %v283
    %v290 = vadd.f32 %v272, %v283
    %v291 = vadd.f32 %v273, %v283
    %v292 = vadd.f32 %v274, %v283
    %293 = vst [vmem:[#allocation5] sm:$0xff] %v285
    %294 = vst [vmem:[#allocation5 + $0x8] sm:$0xff] %v286
    %295 = vst [vmem:[#allocation5 + $0x10] sm:$0xff] %v287
    %296 = vst [vmem:[#allocation5 + $0x18] sm:$0xff] %v288
    %297 = vst [vmem:[#allocation5 + $0x20] sm:$0xff] %v289
    %298 = vst [vmem:[#allocation5 + $0x28] sm:$0xff] %v290
    %299 = vst [vmem:[#allocation5 + $0x30] sm:$0xff] %v291
    %300 = vst [vmem:[#allocation5 + $0x38] sm:$0xff] %v292
    // Predicated region
    $region22: #{tpu_custom_call.1} parent=1 // pred_check
      _
    $region23: #{tpu_custom_call.1} parent=1 // pred_check_branch
      %302 = sbr.rel (0) target = $region25
    $region24: #{tpu_custom_call.1} parent=1 // pred_region
      %s304 = ssub.s32 1024, 1024
      %305 = vsyncadd [#allocation4], %s304
      %s306 = sshll.u32 [#allocation5], 4
      %s307 = int_to_ptr.vmem [resolvable:$true] %s306
      %312 = dma.vmem_to_hbm [thread:$0]  %s307, 1024, %s4, [#allocation4], 512, 512, 32
    $region25: #{tpu_custom_call.1} parent=1 // pred_fallthru
      _
    // Predicated region
    $region26: #{tpu_custom_call.1} parent=1 // pred_check
      _
    $region27: #{tpu_custom_call.1} parent=1 // pred_check_branch
      %314 = sbr.rel (0) target = $region29
    $region28: #{tpu_custom_call.1} parent=1 // pred_region
      %315 = dma.done [#allocation4], 1024
    $region29: #{tpu_custom_call.1} parent=1 // pred_fallthru
      _
    %316 = vsyncpa [#allocation3], 1
    %317 = vsyncpa [#allocation4], 1

// kernel: tpu_custom_call.1
$region0: #{tpu_custom_call.1}
  #allocation0 [shape = 'u32[]', space=smem, size = 0x4, offset = 0x4, fixed_abs, tag = 'smem constant byte address 0x4 - core index']
  #allocation1 [shape = 'u32[144,128]{1,0:T(1,128)}', space=vmem, size = 0x12000, scoped, tag = 'internal scratch']
  %s0 = inlined_call_operand.vmem [shape: bf16[16,48], index: 0, kind: input, shape index: {}]
  %s1 = inlined_call_operand.hbm [shape: bf16[48,512], index: 1, kind: input, shape index: {}]
  %s2 = inlined_call_operand.vmem [shape: f32[16,1], index: 2, kind: input, shape index: {}]
  %s3 = inlined_call_operand.vmem [shape: f32[16,1], index: 3, kind: input, shape index: {}]
  %s4 = inlined_call_operand.hbm [shape: f32[16,512], index: 4, kind: output, shape index: {}]
  %s5 = sld [smem:[#allocation0]]
  $region30: #{tpu_custom_call.1} parent=0
    _
  %s7 = ssub.s32 1, %s5
  %s8 = scalar_select 0, %s7, %s5
  $region1: #{tpu_custom_call.1} parent=0
    #allocation2 [shape = 'u8[49152]{0}', space=vmem, size = 0xc000, scoped, tag = 'input window, operand 1, single buffered']
    #allocation3 [shape = 's32[1]{0}', space=sflag, size = 0x4, scoped, tag = 'scoped memory for tpu_custom_call.1']
    #allocation4 [shape = 's32[1]{0}', space=sflag, size = 0x4, scoped, tag = 'scoped memory for tpu_custom_call.1']
    #allocation5 [shape = 'u8[32768]{0}', space=vmem, size = 0x8000, scoped, tag = 'output window, operand 0, single buffered']
    %9 = vsyncpa [#allocation3], 0
    %10 = vsyncpa [#allocation4], 0
    // Predicated region
    $region2: #{tpu_custom_call.1} parent=1 // pred_check
      _
    $region3: #{tpu_custom_call.1} parent=1 // pred_check_branch
      %12 = sbr.rel (0) target = $region5
    $region4: #{tpu_custom_call.1} parent=1 // pred_region
      _
    $region5: #{tpu_custom_call.1} parent=1 // pred_fallthru
      _
    // Predicated region
    $region6: #{tpu_custom_call.1} parent=1 // pred_check
      _
    $region7: #{tpu_custom_call.1} parent=1 // pred_check_branch
      %14 = sbr.rel (0) target = $region9
    $region8: #{tpu_custom_call.1} parent=1 // pred_region
      %s16 = ssub.s32 1536, 1536
      %17 = vsyncadd [#allocation3], %s16
      %s18 = sshll.u32 [#allocation2], 4
      %s19 = int_to_ptr.vmem [resolvable:$true] %s18
      %24 = dma.hbm_to_vmem [thread:$0]  %s1, 1536, %s19, [#allocation3], 256, 256, 16
    $region9: #{tpu_custom_call.1} parent=1 // pred_fallthru
      _
    // Predicated region
    $region10: #{tpu_custom_call.1} parent=1 // pred_check
      _
    $region11: #{tpu_custom_call.1} parent=1 // pred_check_branch
      %26 = sbr.rel (0) target = $region13
    $region12: #{tpu_custom_call.1} parent=1 // pred_region
      _
    $region13: #{tpu_custom_call.1} parent=1 // pred_fallthru
      _
    // Predicated region
    $region14: #{tpu_custom_call.1} parent=1 // pred_check
      _
    $region15: #{tpu_custom_call.1} parent=1 // pred_check_branch
      %28 = sbr.rel (0) target = $region17
    $region16: #{tpu_custom_call.1} parent=1 // pred_region
      _
    $region17: #{tpu_custom_call.1} parent=1 // pred_fallthru
      _
    // Predicated region
    $region18: #{tpu_custom_call.1} parent=1 // pred_check
      _
    $region19: #{tpu_custom_call.1} parent=1 // pred_check_branch
      %30 = sbr.rel (0) target = $region21
    $region20: #{tpu_custom_call.1} parent=1 // pred_region
      %31 = dma.done [#allocation3], 1536
    $region21: #{tpu_custom_call.1} parent=1 // pred_fallthru
      _
    %v33 = vld [vmem:[%s0] sm:$0xf]
    %v34 = vld [vmem:[%s0 + $0x4] sm:$0xf]
    %v35 = vld [vmem:[#allocation2] sm:$0xff]
    %v36 = vld [vmem:[#allocation2 + $0x8] sm:$0xff]
    %v37 = vld [vmem:[#allocation2 + $0x10] sm:$0xff]
    %v38 = vld [vmem:[#allocation2 + $0x18] sm:$0xff]
    %v39 = vld [vmem:[#allocation2 + $0x20] sm:$0xff]
    %v40 = vld [vmem:[#allocation2 + $0x28] sm:$0xff]
    %v41 = vld [vmem:[#allocation2 + $0x30] sm:$0xff]
    %v42 = vld [vmem:[#allocation2 + $0x38] sm:$0xff]
    %v43 = vld [vmem:[#allocation2 + $0x40] sm:$0xff]
    %v44 = vld [vmem:[#allocation2 + $0x48] sm:$0xff]
    %v45 = vld [vmem:[#allocation2 + $0x50] sm:$0xff]
    %v46 = vld [vmem:[#allocation2 + $0x58] sm:$0xff]
    %v49 = vunpack.c.l.b16 %v33
    %v50 = vunpack.c.l.b16 %v34
    %v51 = vpack.c.b16 %v50, %v49
    %v64 = vunpack.c.l.b16 %v35
    %v65 = vunpack.c.h.b16 %v35
    %v66 = vunpack.c.l.b16 %v36
    %v67 = vunpack.c.h.b16 %v36
    %v68 = vunpack.c.l.b16 %v37
    %v69 = vunpack.c.h.b16 %v37
    %v70 = vunpack.c.l.b16 %v38
    %v71 = vunpack.c.h.b16 %v38
    %v72 = vunpack.c.l.b16 %v39
    %v73 = vunpack.c.h.b16 %v39
    %v74 = vunpack.c.l.b16 %v40
    %v75 = vunpack.c.h.b16 %v40
    %v76 = vunpack.c.l.b16 %v41
    %v77 = vunpack.c.h.b16 %v41
    %v78 = vunpack.c.l.b16 %v42
    %v79 = vunpack.c.h.b16 %v42
    %v80 = vunpack.c.l.b16 %v43
    %v81 = vunpack.c.h.b16 %v43
    %v82 = vunpack.c.l.b16 %v44
    %v83 = vunpack.c.h.b16 %v44
    %v84 = vunpack.c.l.b16 %v45
    %v85 = vunpack.c.h.b16 %v45
    %v86 = vunpack.c.l.b16 %v46
    %v87 = vunpack.c.h.b16 %v46
    %v88 = vpack.c.b16 %v68, %v64
    %v89 = vpack.c.b16 %v69, %v65
    %v90 = vpack.c.b16 %v70, %v66
    %v91 = vpack.c.b16 %v71, %v67
    %v92 = vpack.c.b16 %v76, %v72
    %v93 = vpack.c.b16 %v77, %v73
    %v94 = vpack.c.b16 %v78, %v74
    %v95 = vpack.c.b16 %v79, %v75
    %v96 = vpack.c.b16 %v84, %v80
    %v97 = vpack.c.b16 %v85, %v81
    %v98 = vpack.c.b16 %v86, %v82
    %v99 = vpack.c.b16 %v87, %v83
    %vm112 = vcmask 392192
    %v114 = vsel %vm112, %v51, 0
    %116 = vmatprep.subr.bf16.mxu0 0
    %117 = vmatpush1.bf16.msra.mxu0 0
    %118 = vmatprep.subr.bf16.mxu0 0
    %119 = vmatpush1.bf16.msra.mxu0 0
    %120 = vmatprep.subr.bf16.mxu0 0
    %121 = vmatpush1.bf16.msra.mxu0 0
    %122 = vmatprep.subr.bf16.mxu0 0
    %123 = vmatpush1.bf16.msra.mxu0 0
    %124 = vmatprep.subr.bf16.mxu0 0
    %125 = vmatpush1.bf16.msra.mxu0 0
    %126 = vmatprep.subr.bf16.mxu0 %v97
    %127 = vmatpush1.bf16.msra.mxu0 %v96
    %128 = vmatprep.subr.bf16.mxu0 %v93
    %129 = vmatpush1.bf16.msra.mxu0 %v92
    %130 = vmatprep.subr.bf16.mxu0 %v89
    %131 = vmatpush1.bf16.msra.mxu0 %v88
    %132 = vmatprep.subr.bf16.mxu0 0
    %133 = vmatpush2.bf16.msra.mxu0 0
    %134 = vmatprep.subr.bf16.mxu0 0
    %135 = vmatpush2.bf16.msra.mxu0 0
    %136 = vmatprep.subr.bf16.mxu0 0
    %137 = vmatpush2.bf16.msra.mxu0 0
    %138 = vmatprep.subr.bf16.mxu0 0
    %139 = vmatpush2.bf16.msra.mxu0 0
    %140 = vmatprep.subr.bf16.mxu0 0
    %141 = vmatpush2.bf16.msra.mxu0 0
    %142 = vmatprep.subr.bf16.mxu0 0
    %143 = vmatpush2.bf16.msra.mxu0 0
    %144 = vmatprep.subr.bf16.mxu0 0
    %145 = vmatpush2.bf16.msra.mxu0 0
    %146 = vmatprep.subr.bf16.mxu0 0
    %147 = vmatpush2.bf16.msra.mxu0 0
    %148 = vmatprep.mubr.bf16.mxu0 0
    %149 = vmatmul.mubr.bf16.gmra.mxu0 %v114
    %v150 = vpop.f32.mrf.mxu0
    %v151 = vadd.f32 0.0, %v150
    %v152 = vpop.f32.mrf.mxu0
    %v153 = vadd.f32 0.0, %v152
    %v154 = vpop.f32.mrf.mxu0
    %v155 = vadd.f32 0.0, %v154
    %v156 = vpop.f32.mrf.mxu0
    %v157 = vadd.f32 0.0, %v156
    %158 = vdwg.mxu0
    %159 = vmatprep.subr.bf16.mxu0 0
    %160 = vmatpush1.bf16.msra.mxu0 0
    %161 = vmatprep.subr.bf16.mxu0 0
    %162 = vmatpush1.bf16.msra.mxu0 0
    %163 = vmatprep.subr.bf16.mxu0 0
    %164 = vmatpush1.bf16.msra.mxu0 0
    %165 = vmatprep.subr.bf16.mxu0 0
    %166 = vmatpush1.bf16.msra.mxu0 0
    %167 = vmatprep.subr.bf16.mxu0 0
    %168 = vmatpush1.bf16.msra.mxu0 0
    %169 = vmatprep.subr.bf16.mxu0 %v99
    %170 = vmatpush1.bf16.msra.mxu0 %v98
    %171 = vmatprep.subr.bf16.mxu0 %v95
    %172 = vmatpush1.bf16.msra.mxu0 %v94
    %173 = vmatprep.subr.bf16.mxu0 %v91
    %174 = vmatpush1.bf16.msra.mxu0 %v90
    %175 = vmatprep.subr.bf16.mxu0 0
    %176 = vmatpush2.bf16.msra.mxu0 0
    %177 = vmatprep.subr.bf16.mxu0 0
    %178 = vmatpush2.bf16.msra.mxu0 0
    %179 = vmatprep.subr.bf16.mxu0 0
    %180 = vmatpush2.bf16.msra.mxu0 0
    %181 = vmatprep.subr.bf16.mxu0 0
    %182 = vmatpush2.bf16.msra.mxu0 0
    %183 = vmatprep.subr.bf16.mxu0 0
    %184 = vmatpush2.bf16.msra.mxu0 0
    %185 = vmatprep.subr.bf16.mxu0 0
    %186 = vmatpush2.bf16.msra.mxu0 0
    %187 = vmatprep.subr.bf16.mxu0 0
    %188 = vmatpush2.bf16.msra.mxu0 0
    %189 = vmatprep.subr.bf16.mxu0 0
    %190 = vmatpush2.bf16.msra.mxu0 0
    %191 = vmatprep.mubr.bf16.mxu0 0
    %192 = vmatmul.mubr.bf16.gmra.mxu0 %v114
    %v193 = vpop.f32.mrf.mxu0
    %v194 = vadd.f32 0.0, %v193
    %v195 = vpop.f32.mrf.mxu0
    %v196 = vadd.f32 0.0, %v195
    %v197 = vpop.f32.mrf.mxu0
    %v198 = vadd.f32 0.0, %v197
    %v199 = vpop.f32.mrf.mxu0
    %v200 = vadd.f32 0.0, %v199
    %201 = vdwg.mxu0
    %v202 = vadd.f32 %v151, %v153
    %v203 = vadd.f32 %v202, %v194
    %v204 = vadd.f32 %v203, %v196
    %205 = vadd.xlane.f32.xlu0 %v204
    %v206 = vpop.xlane.xlu0 %205
    %v207 = vadd.f32 %v155, %v157
    %v208 = vadd.f32 %v207, %v198
    %v209 = vadd.f32 %v208, %v200
    %210 = vadd.xlane.f32.xlu0 %v209
    %v211 = vpop.xlane.xlu0 %210
    %v212 = vrcp.pop 512.0
    %v213 = vmul.f32 %v206, %v212
    %v214 = vmul.f32 %v211, %v212
    %v215 = vsub.f32 %v151, %v213
    %v216 = vsub.f32 %v153, %v213
    %v217 = vsub.f32 %v194, %v213
    %v218 = vsub.f32 %v196, %v213
    %v219 = vsub.f32 %v155, %v214
    %v220 = vsub.f32 %v157, %v214
    %v221 = vsub.f32 %v198, %v214
    %v222 = vsub.f32 %v200, %v214
    %v223 = vmul.f32 %v215, %v215
    %v224 = vmul.f32 %v216, %v216
    %v225 = vmul.f32 %v217, %v217
    %v226 = vmul.f32 %v218, %v218
    %v227 = vmul.f32 %v219, %v219
    %v228 = vmul.f32 %v220, %v220
    %v229 = vmul.f32 %v221, %v221
    %v230 = vmul.f32 %v222, %v222
    %v231 = vadd.f32 %v223, %v224
    %v232 = vadd.f32 %v231, %v225
    %v233 = vadd.f32 %v232, %v226
    %234 = vadd.xlane.f32.xlu0 %v233
    %v235 = vpop.xlane.xlu0 %234
    %v236 = vadd.f32 %v227, %v228
    %v237 = vadd.f32 %v236, %v229
    %v238 = vadd.f32 %v237, %v230
    %239 = vadd.xlane.f32.xlu0 %v238
    %v240 = vpop.xlane.xlu0 %239
    %v241 = vmul.f32 %v235, %v212
    %v242 = vmul.f32 %v240, %v212
    %v243 = vadd.f32 %v241, 1e-05
    %v244 = vadd.f32 %v242, 1e-05
    %v245 = vrsqrt.pop %v243
    %v246 = vrsqrt.pop %v244
    %v247 = vld [vmem:[%s2] sm:$0xff]
    %v248 = vld [vmem:[%s2 + $0x8] sm:$0xff]
    %v249 = vmul.f32 %v247, %v245
    %v250 = vmul.f32 %v248, %v246
    %v251 = vld [vmem:[%s3] sm:$0xff]
    %v252 = vld [vmem:[%s3 + $0x8] sm:$0xff]
    %v253 = vmul.f32 %v213, %v249
    %v254 = vmul.f32 %v214, %v250
    %v255 = vsub.f32 %v251, %v253
    %v256 = vsub.f32 %v252, %v254
    %258 = vset.pattern.permute.xlu0 0
    %259 = vperm.xlu0 %258, %v249
    %v260 = vpop.permute.xlu0 %259
    %263 = vset.pattern.permute.xlu0 0
    %264 = vperm.xlu0 %263, %v250
    %v265 = vpop.permute.xlu0 %264
    %v267 = vmul.f32 %v151, %v260
    %v268 = vmul.f32 %v153, %v260
    %v269 = vmul.f32 %v194, %v260
    %v270 = vmul.f32 %v196, %v260
    %v271 = vmul.f32 %v155, %v265
    %v272 = vmul.f32 %v157, %v265
    %v273 = vmul.f32 %v198, %v265
    %v274 = vmul.f32 %v200, %v265
    %276 = vset.pattern.permute.xlu0 0
    %277 = vperm.xlu0 %276, %v255
    %v278 = vpop.permute.xlu0 %277
    %281 = vset.pattern.permute.xlu0 0
    %282 = vperm.xlu0 %281, %v256
    %v283 = vpop.permute.xlu0 %282
    %v285 = vadd.f32 %v267, %v278
    %v286 = vadd.f32 %v268, %v278
    %v287 = vadd.f32 %v269, %v278
    %v288 = vadd.f32 %v270, %v278
    %v289 = vadd.f32 %v271, %v283
    %v290 = vadd.f32 %v272, %v283
    %v291 = vadd.f32 %v273, %v283
    %v292 = vadd.f32 %v274, %v283
    %293 = vst [vmem:[#allocation5] sm:$0xff] %v285
    %294 = vst [vmem:[#allocation5 + $0x8] sm:$0xff] %v286
    %295 = vst [vmem:[#allocation5 + $0x10] sm:$0xff] %v287
    %296 = vst [vmem:[#allocation5 + $0x18] sm:$0xff] %v288
    %297 = vst [vmem:[#allocation5 + $0x20] sm:$0xff] %v289
    %298 = vst [vmem:[#allocation5 + $0x28] sm:$0xff] %v290
    %299 = vst [vmem:[#allocation5 + $0x30] sm:$0xff] %v291
    %300 = vst [vmem:[#allocation5 + $0x38] sm:$0xff] %v292
    // Predicated region
    $region22: #{tpu_custom_call.1} parent=1 // pred_check
      _
    $region23: #{tpu_custom_call.1} parent=1 // pred_check_branch
      %302 = sbr.rel (0) target = $region25
    $region24: #{tpu_custom_call.1} parent=1 // pred_region
      %s304 = ssub.s32 1024, 1024
      %305 = vsyncadd [#allocation4], %s304
      %s306 = sshll.u32 [#allocation5], 4
      %s307 = int_to_ptr.vmem [resolvable:$true] %s306
      %312 = dma.vmem_to_hbm [thread:$0]  %s307, 1024, %s4, [#allocation4], 512, 512, 32
    $region25: #{tpu_custom_call.1} parent=1 // pred_fallthru
      _
    // Predicated region
    $region26: #{tpu_custom_call.1} parent=1 // pred_check
      _
    $region27: #{tpu_custom_call.1} parent=1 // pred_check_branch
      %314 = sbr.rel (0) target = $region29
    $region28: #{tpu_custom_call.1} parent=1 // pred_region
      %315 = dma.done [#allocation4], 1024
    $region29: #{tpu_custom_call.1} parent=1 // pred_fallthru
      _
    %316 = vsyncpa [#allocation3], 1
    %317 = vsyncpa [#allocation4], 1

</llo_original>
